<compile_context>
chip_gen: v7x
topology: tpu7x:2x2x1
jax: 0.10.0
libtpu: 0.0.40
codegen_flags: <defaults>
</compile_context>

<pallas_src>
import functools

import jax
import jax.numpy as jnp
from jax.experimental import pallas as pl
from jax.experimental.pallas import tpu as pltpu


def _se_kernel(x_ref, w1t_ref, b1_ref, w2t_ref, b2_ref, o_ref, *, inv_hw):
    # x_ref  : (Bt, C, HW)   activation tile (input dtype, unpadded lanes)
    # w1t_ref: (C, Cr)  f32  pre-transposed fc1 weight
    # b1_ref : (1, Cr)  f32
    # w2t_ref: (Cr, C)  f32  pre-transposed fc2 weight
    # b2_ref : (1, C)   f32
    x = x_ref[...]                                            # no f32 copy of the tile

    # Squeeze: global average pool over the spatial lane axis, f32 accumulation.
    y = jnp.sum(x, axis=-1, dtype=jnp.float32) * inv_hw       # (Bt, C)

    # FC1 + ReLU (weights already transposed/cast in the wrapper).
    h = jnp.dot(y, w1t_ref[...], preferred_element_type=jnp.float32) + b1_ref[...]
    h = jnp.maximum(h, 0.0)                                   # (Bt, Cr)

    # FC2 + h_sigmoid: relu6(z + 3) / 6, gate kept in f32.
    z = jnp.dot(h, w2t_ref[...], preferred_element_type=jnp.float32) + b2_ref[...]
    s = jnp.clip(z + 3.0, 0.0, 6.0) * (1.0 / 6.0)             # (Bt, C)

    # Excite: multiply in the input dtype; only the small gate is cast down.
    o_ref[...] = (x * s.astype(x.dtype)[:, :, None]).astype(o_ref.dtype)


def _pick_bt(b, cap):
    """Pick a batch-tile size <= cap.  Prefer an exact divisor of b (all blocks
    full) as long as it is not much smaller than cap; otherwise accept a
    partial last block (its rows beyond b are never written back, and every
    row's gate is computed independently, so garbage rows cannot contaminate
    valid ones)."""
    cap = max(1, min(b, cap))
    for d in range(cap, 0, -1):
        if b % d == 0 and 2 * d > cap:
            return d
    return cap


def se_layer(x, w1, b1, w2, b2):
    """SELayer forward. x: (B, C, H, W) NCHW; w1: (Cr, C), b1: (Cr,),
    w2: (C, Cr), b2: (C,). Returns the same shape/dtype as x."""
    B, C, H, W = x.shape
    Cr = w1.shape[0]
    HW = H * W
    itemsize = jnp.dtype(x.dtype).itemsize

    # Contiguous (free) reshape: channels on sublanes, spatial on lanes,
    # NO padding and NO final slice (masked tail stores inside the kernel
    # are far cheaper than extra HBM passes).
    x3 = x.reshape(B, C, HW)

    # Pre-transpose / pre-cast the tiny FC weights once, outside the kernel.
    w1t = w1.T.astype(jnp.float32)             # (C, Cr)
    w2t = w2.T.astype(jnp.float32)             # (Cr, C)
    b1_2d = b1.reshape(1, Cr).astype(jnp.float32)
    b2_2d = b2.reshape(1, C).astype(jnp.float32)

    # Generation-aware VMEM budgeting (v5e/v6e: 128 MiB, v7x: 64 MiB per TC).
    try:
        vmem_cap = int(pltpu.get_tpu_info().vmem_capacity_bytes)
    except Exception:
        vmem_cap = 64 << 20                    # conservative fallback

    # Block-byte target: 4-8 MiB class blocks on big-VMEM chips, smaller on v7x.
    target_block = (6 << 20) if vmem_cap >= (100 << 20) else (3 << 20)

    per_batch_bytes = max(1, C * HW * itemsize)
    bt_cap = max(1, target_block // per_batch_bytes)
    # Keep >= 4 grid steps when the batch allows: v7x has 2 TensorCores and
    # each needs >= 2 steps for cross-step DMA overlap; the extra steps are
    # near-free (~0.35 us each) on single-core v5e/v6e.
    if B >= 4:
        bt_cap = min(bt_cap, B // 4)
    elif B >= 2:
        bt_cap = min(bt_cap, B // 2)
    Bt = _pick_bt(B, bt_cap)
    grid_steps = pl.cdiv(B, Bt)

    block_bytes = Bt * per_batch_bytes
    weight_bytes = (w1t.size + w2t.size + b1_2d.size + b2_2d.size) * 4
    # Double-buffered input + output blocks, weights, and headroom; cap well
    # below the physical VMEM of the current generation.
    need = 4 * block_bytes + weight_bytes + (4 << 20)
    vmem_ceiling = max(32 << 20, vmem_cap - (16 << 20))
    vmem_limit = int(min(vmem_ceiling, max(32 << 20, need)))

    cost = pl.CostEstimate(
        flops=2 * B * C * HW + 4 * B * C * Cr,
        transcendentals=0,
        bytes_accessed=2 * B * C * HW * itemsize + weight_bytes,
    )

    kernel = functools.partial(_se_kernel, inv_hw=1.0 / float(HW))

    out3 = pl.pallas_call(
        kernel,
        out_shape=jax.ShapeDtypeStruct((B, C, HW), x.dtype),
        grid_spec=pltpu.PrefetchScalarGridSpec(
            num_scalar_prefetch=0,
            grid=(grid_steps,),
            in_specs=[
                pl.BlockSpec((Bt, C, HW), lambda i: (i, 0, 0)),
                pl.BlockSpec((C, Cr), lambda i: (0, 0)),
                pl.BlockSpec((1, Cr), lambda i: (0, 0)),
                pl.BlockSpec((Cr, C), lambda i: (0, 0)),
                pl.BlockSpec((1, C), lambda i: (0, 0)),
            ],
            out_specs=pl.BlockSpec((Bt, C, HW), lambda i: (i, 0, 0)),
        ),
        compiler_params=pltpu.CompilerParams(
            dimension_semantics=("parallel",),
            vmem_limit_bytes=vmem_limit,
        ),
        cost_estimate=cost,
    )(x3, w1t, b1_2d, w2t, b2_2d)

    return out3.reshape(B, C, H, W)


def se_layer_ref(x, w1, b1, w2, b2):
    """Plain-JAX reference of the PyTorch forward."""
    y = jnp.mean(x.astype(jnp.float32), axis=(2, 3))           # (B, C)
    h = jnp.maximum(y @ w1.T + b1, 0.0)                        # (B, Cr)
    z = h @ w2.T + b2                                          # (B, C)
    s = jnp.clip(z + 3.0, 0.0, 6.0) / 6.0
    return (x.astype(jnp.float32) * s[:, :, None, None]).astype(x.dtype)


def _make_params(key, C, Cr):
    k1, k2, k3, k4 = jax.random.split(key, 4)
    bound1 = 1.0 / (C ** 0.5)
    w1 = jax.random.uniform(k1, (Cr, C), jnp.float32, -bound1, bound1)
    b1 = jax.random.uniform(k2, (Cr,), jnp.float32, -bound1, bound1)
    bound2 = 1.0 / (Cr ** 0.5)
    w2 = jax.random.uniform(k3, (C, Cr), jnp.float32, -bound2, bound2)
    b2 = jax.random.uniform(k4, (C,), jnp.float32, -bound2, bound2)
    return w1, b1, w2, b2


if __name__ == "__main__":
    se_jit = jax.jit(se_layer)

    # Main check: small NCHW input, reduction=4 (as in MedViT's SELayer).
    B, C, H, W = 2, 4, 16, 16
    Cr = C // 4
    key = jax.random.PRNGKey(0)
    kx, kp = jax.random.split(key)
    x = jax.random.normal(kx, (B, C, H, W), dtype=jnp.float32)
    w1, b1, w2, b2 = _make_params(kp, C, Cr)

    out = jax.block_until_ready(se_jit(x, w1, b1, w2, b2))
    ref = se_layer_ref(x, w1, b1, w2, b2)
    assert out.shape == (B, C, H, W)
    assert jnp.allclose(out, ref, atol=1e-5, rtol=1e-5), "mismatch vs reference (16x16)"

    # Second check: HW not a multiple of 128 (7x7 = 49) to exercise the
    # unpadded, masked-tail-store path that replaced the old pad+slice.
    B2, C2, H2, W2 = 2, 8, 7, 7
    Cr2 = C2 // 4
    kx2, kp2 = jax.random.split(jax.random.PRNGKey(0), 2)
    x2 = jax.random.normal(kx2, (B2, C2, H2, W2), dtype=jnp.float32)
    p2 = _make_params(kp2, C2, Cr2)

    out2 = jax.block_until_ready(se_jit(x2, *p2))
    ref2 = se_layer_ref(x2, *p2)
    assert out2.shape == (B2, C2, H2, W2)
    assert jnp.allclose(out2, ref2, atol=1e-5, rtol=1e-5), "mismatch vs reference (7x7)"

    print("KERNEL_OK")
</pallas_src>

<mosaic_0001>
module attributes {stable_mosaic.version = 11 : i64} {
  func.func @_se_kernel(%arg0: i32, %arg1: memref<1x4x256xf32, #tpu.memory_space<vmem>>, %arg2: memref<4x1xf32, #tpu.memory_space<vmem>>, %arg3: memref<1x1xf32, #tpu.memory_space<vmem>>, %arg4: memref<1x4xf32, #tpu.memory_space<vmem>>, %arg5: memref<1x4xf32, #tpu.memory_space<vmem>>, %arg6: memref<1x4x256xf32, #tpu.memory_space<vmem>>) attributes {dimension_semantics = [#tpu.dimension_semantics<parallel>], iteration_bounds = array<i64: 2>, scalar_prefetch = 0 : i64, scratch_operands = 0 : i64, tpu.core_type = #tpu.core_type<tc>, window_params = [{transform_indices = @transform_0, window_bounds = array<i64: 1, 4, 256>}, {pipeline_mode = #tpu.pipeline_mode<synchronous>, transform_indices = @transform_1, window_bounds = array<i64: 4, 1>}, {pipeline_mode = #tpu.pipeline_mode<synchronous>, transform_indices = @transform_2, window_bounds = array<i64: 1, 1>}, {pipeline_mode = #tpu.pipeline_mode<synchronous>, transform_indices = @transform_3, window_bounds = array<i64: 1, 4>}, {pipeline_mode = #tpu.pipeline_mode<synchronous>, transform_indices = @transform_4, window_bounds = array<i64: 1, 4>}, {transform_indices = @transform_5, window_bounds = array<i64: 1, 4, 256>}]} {
    %c0 = arith.constant 0 : index
    %c0_0 = arith.constant 0 : index
    %c0_1 = arith.constant 0 : index
    %0 = vector.load %arg1[%c0, %c0_0, %c0_1] : memref<1x4x256xf32, #tpu.memory_space<vmem>>, vector<1x4x256xf32>
    %cst = arith.constant dense<0.000000e+00> : vector<1x4xf32>
    %1 = vector.multi_reduction <add>, %0, %cst [2] : vector<1x4x256xf32> to vector<1x4xf32>
    %cst_2 = arith.constant 3.906250e-03 : f32
    %2 = vector.broadcast %cst_2 : f32 to vector<1x4xf32>
    %3 = arith.mulf %1, %2 : vector<1x4xf32>
    %c0_3 = arith.constant 0 : index
    %c0_4 = arith.constant 0 : index
    %4 = vector.load %arg2[%c0_3, %c0_4] : memref<4x1xf32, #tpu.memory_space<vmem>>, vector<4x1xf32>
    %cst_5 = arith.constant dense<0.000000e+00> : vector<1x1xf32>
    %5 = tpu.matmul %3, %4, %cst_5 {dimension_numbers = #tpu.dot_dimension_numbers<[1], [0], [0], [1], [0, 0, 1, 1], [], []>} : vector<1x4xf32>, vector<4x1xf32>, vector<1x1xf32> -> vector<1x1xf32>
    %c0_6 = arith.constant 0 : index
    %c0_7 = arith.constant 0 : index
    %6 = vector.load %arg3[%c0_6, %c0_7] : memref<1x1xf32, #tpu.memory_space<vmem>>, vector<1x1xf32>
    %7 = arith.addf %5, %6 : vector<1x1xf32>
    %cst_8 = arith.constant 0.000000e+00 : f32
    %8 = vector.broadcast %cst_8 : f32 to vector<1x1xf32>
    %9 = arith.maximumf %7, %8 : vector<1x1xf32>
    %c0_9 = arith.constant 0 : index
    %c0_10 = arith.constant 0 : index
    %10 = vector.load %arg4[%c0_9, %c0_10] : memref<1x4xf32, #tpu.memory_space<vmem>>, vector<1x4xf32>
    %cst_11 = arith.constant dense<0.000000e+00> : vector<1x4xf32>
    %11 = tpu.matmul %9, %10, %cst_11 {dimension_numbers = #tpu.dot_dimension_numbers<[1], [0], [0], [1], [0, 0, 1, 1], [], []>} : vector<1x1xf32>, vector<1x4xf32>, vector<1x4xf32> -> vector<1x4xf32>
    %c0_12 = arith.constant 0 : index
    %c0_13 = arith.constant 0 : index
    %12 = vector.load %arg5[%c0_12, %c0_13] : memref<1x4xf32, #tpu.memory_space<vmem>>, vector<1x4xf32>
    %13 = arith.addf %11, %12 : vector<1x4xf32>
    %cst_14 = arith.constant 3.000000e+00 : f32
    %14 = vector.broadcast %cst_14 : f32 to vector<1x4xf32>
    %15 = arith.addf %13, %14 : vector<1x4xf32>
    %cst_15 = arith.constant 0.000000e+00 : f32
    %cst_16 = arith.constant 6.000000e+00 : f32
    %16 = vector.broadcast %cst_15 : f32 to vector<1x4xf32>
    %17 = arith.maximumf %16, %15 : vector<1x4xf32>
    %18 = vector.broadcast %cst_16 : f32 to vector<1x4xf32>
    %19 = arith.minimumf %18, %17 : vector<1x4xf32>
    %cst_17 = arith.constant 0.166666672 : f32
    %20 = vector.broadcast %cst_17 : f32 to vector<1x4xf32>
    %21 = arith.mulf %19, %20 : vector<1x4xf32>
    %22 = vector.shape_cast %21 : vector<1x4xf32> to vector<1x4x1xf32>
    %23 = vector.broadcast %22 : vector<1x4x1xf32> to vector<1x4x256xf32>
    %24 = arith.mulf %0, %23 : vector<1x4x256xf32>
    %c0_18 = arith.constant 0 : index
    %c0_19 = arith.constant 0 : index
    %c0_20 = arith.constant 0 : index
    %25 = vector.load %arg6[%c0_18, %c0_19, %c0_20] : memref<1x4x256xf32, #tpu.memory_space<vmem>>, vector<1x4x256xf32>
    tpu.vector_store %arg6[%c0_18, %c0_19, %c0_20], %24 {strides = array<i32>} : memref<1x4x256xf32, #tpu.memory_space<vmem>>, vector<1x4x256xf32>,
    return
  }
  func.func @transform_0(%arg0: i32) -> (i32, i32, i32) {
    %c0_i32 = arith.constant 0 : i32
    %c0_i32_0 = arith.constant 0 : i32
    %c0_i32_1 = arith.constant 0 : i32
    return %arg0, %c0_i32, %c0_i32_0 : i32, i32, i32
  }
  func.func @transform_1(%arg0: i32) -> (i32, i32) {
    %c0_i32 = arith.constant 0 : i32
    %c0_i32_0 = arith.constant 0 : i32
    %c0_i32_1 = arith.constant 0 : i32
    return %c0_i32, %c0_i32_0 : i32, i32
  }
  func.func @transform_2(%arg0: i32) -> (i32, i32) {
    %c0_i32 = arith.constant 0 : i32
    %c0_i32_0 = arith.constant 0 : i32
    %c0_i32_1 = arith.constant 0 : i32
    return %c0_i32, %c0_i32_0 : i32, i32
  }
  func.func @transform_3(%arg0: i32) -> (i32, i32) {
    %c0_i32 = arith.constant 0 : i32
    %c0_i32_0 = arith.constant 0 : i32
    %c0_i32_1 = arith.constant 0 : i32
    return %c0_i32, %c0_i32_0 : i32, i32
  }
  func.func @transform_4(%arg0: i32) -> (i32, i32) {
    %c0_i32 = arith.constant 0 : i32
    %c0_i32_0 = arith.constant 0 : i32
    %c0_i32_1 = arith.constant 0 : i32
    return %c0_i32, %c0_i32_0 : i32, i32
  }
  func.func @transform_5(%arg0: i32) -> (i32, i32, i32) {
    %c0_i32 = arith.constant 0 : i32
    %c0_i32_0 = arith.constant 0 : i32
    %c0_i32_1 = arith.constant 0 : i32
    return %arg0, %c0_i32, %c0_i32_0 : i32, i32, i32
  }
}

</mosaic_0001>

<llo_original>
// kernel: se_layer.1
$region0: #{se_layer.1}
  #allocation0 [shape = 'u32[]', space=smem, size = 0x4, offset = 0x4, fixed_abs, tag = 'smem constant byte address 0x4 - core index']
  #allocation1 [shape = 'u32[144,128]{1,0:T(1,128)}', space=vmem, size = 0x12000, scoped, tag = 'internal scratch']
  #allocation2 [shape = 'f32[1,1]{1,0:T(1,128)S(1)}', space=vmem, size = 0x200, scoped, tag = 'scoped memory for se_layer.1']
  %s0 = inlined_call_operand.vmem [shape: f32[2,4,256], index: 0, kind: input, shape index: {}]
  %s1 = inlined_call_operand.vmem [shape: f32[4,1], index: 1, kind: input, shape index: {}]
  %s2 = inlined_call_operand.<no memory space> [shape: f32[1,1], index: 2, kind: input, shape index: {}]
  %s3 = inlined_call_operand.vmem [shape: f32[1,4], index: 3, kind: input, shape index: {}]
  %s4 = inlined_call_operand.vmem [shape: f32[1,4], index: 4, kind: input, shape index: {}]
  %s5 = inlined_call_operand.vmem [shape: f32[2,4,256], index: 5, kind: output, shape index: {}]
  %s6 = sld [smem:[#allocation0]]
  $region53: #{se_layer.1} parent=0
    _
  %s8 = ssub.s32 1, %s6
  %s9 = scalar_select 0, %s8, %s6
  %v10 = vstv %s2
  %11 = vst [vmem:[#allocation2] sm:$0x1] %v10
  loop: start=0, step=1, limit=4
  $region2: #{se_layer.1} parent=0 // loop_pre_header
    _
  $region3: #{se_layer.1} parent=0 // loop_header
    %s13 = sphi 0, %s17
    %p14 = scmp.ge.s32.totalorder %s13, 4
    %s23 = sphi 0, %s25
    %s26 = sphi 0, %s23
    %s27 = sphi 0, %s26
    %s43 = sphi 0, %s27
    %s47 = sphi 0, %s47
    %s49 = sphi 0, %s47
    %s50 = sphi 0, %s49
    %s64 = sphi 0, %s50
    %s68 = sphi 0, %s68
    %s70 = sphi 0, %s68
    %s71 = sphi 0, %s70
    %s85 = sphi 0, %s71
    %s89 = sphi 0, %s89
    %s91 = sphi 0, %s89
    %s92 = sphi 0, %s91
    %s106 = sphi 0, %s92
    %s110 = sphi 0, %s110
    %s112 = sphi 0, %s110
    %s113 = sphi 0, %s112
    %s127 = sphi 0, %s113
    %s133 = sphi 0, %s135
    %s136 = sphi 0, %s133
    %s137 = sphi 0, %s136
    %s153 = sphi 0, %s137
  $region4: #{se_layer.1} parent=0 // loop_header_branch
    %16 = sbr.rel (%p14) target = $region8
  $region5: #{se_layer.1} parent=0 // loop_body
    %s18 = ssub.s32 %s13, 1
    %s19 = ssub.s32 %s13, 2
    %s20 = sadd.s32 %s13, 1
    %s21 = ssub.s32 %s13, %s20
    %p22 = scmp.eq.s32.totalorder %s21, 0
    %s24 = sadd.s32 %s23, 1
    %s25 = scalar_select %p22, %s23, %s24
    %p28 = pneg %p22
    %p29 = scmp.eq.s32.totalorder %s13, 1
    %p30 = por %p28, %p29
    %p31 = scmp.ne.s32.totalorder %s23, %s26
    %p32 = scmp.eq.s32.totalorder %s13, 0
    %p33 = por %p31, %p32
    %p34 = scmp.ne.s32.totalorder %s23, %s26
    %p35 = scmp.eq.s32.totalorder %s18, 1
    %p36 = por %p34, %p35
    %p37 = scmp.ne.s32.totalorder %s26, %s27
    %p38 = scmp.eq.s32.totalorder %s18, 0
    %p39 = por %p37, %p38
    %p40 = scmp.ne.s32.totalorder %s26, %s27
    %p41 = scmp.eq.s32.totalorder %s19, 1
    %p42 = por %p40, %p41
    %p44 = scmp.ne.s32.totalorder %s27, %s43
    %p45 = scmp.eq.s32.totalorder %s19, 0
    %p46 = por %p44, %p45
    %s48 = sadd.s32 %s47, 1
    %p51 = scmp.eq.s32.totalorder %s13, 1
    %p52 = scmp.ne.s32.totalorder %s47, %s49
    %p53 = scmp.eq.s32.totalorder %s13, 0
    %p54 = por %p52, %p53
    %p55 = scmp.ne.s32.totalorder %s47, %s49
    %p56 = scmp.eq.s32.totalorder %s18, 1
    %p57 = por %p55, %p56
    %p58 = scmp.ne.s32.totalorder %s49, %s50
    %p59 = scmp.eq.s32.totalorder %s18, 0
    %p60 = por %p58, %p59
    %p61 = scmp.ne.s32.totalorder %s49, %s50
    %p62 = scmp.eq.s32.totalorder %s19, 1
    %p63 = por %p61, %p62
    %p65 = scmp.ne.s32.totalorder %s50, %s64
    %p66 = scmp.eq.s32.totalorder %s19, 0
    %p67 = por %p65, %p66
    %s69 = sadd.s32 %s68, 1
    %p72 = scmp.eq.s32.totalorder %s13, 1
    %p73 = scmp.ne.s32.totalorder %s68, %s70
    %p74 = scmp.eq.s32.totalorder %s13, 0
    %p75 = por %p73, %p74
    %p76 = scmp.ne.s32.totalorder %s68, %s70
    %p77 = scmp.eq.s32.totalorder %s18, 1
    %p78 = por %p76, %p77
    %p79 = scmp.ne.s32.totalorder %s70, %s71
    %p80 = scmp.eq.s32.totalorder %s18, 0
    %p81 = por %p79, %p80
    %p82 = scmp.ne.s32.totalorder %s70, %s71
    %p83 = scmp.eq.s32.totalorder %s19, 1
    %p84 = por %p82, %p83
    %p86 = scmp.ne.s32.totalorder %s71, %s85
    %p87 = scmp.eq.s32.totalorder %s19, 0
    %p88 = por %p86, %p87
    %s90 = sadd.s32 %s89, 1
    %p93 = scmp.eq.s32.totalorder %s13, 1
    %p94 = scmp.ne.s32.totalorder %s89, %s91
    %p95 = scmp.eq.s32.totalorder %s13, 0
    %p96 = por %p94, %p95
    %p97 = scmp.ne.s32.totalorder %s89, %s91
    %p98 = scmp.eq.s32.totalorder %s18, 1
    %p99 = por %p97, %p98
    %p100 = scmp.ne.s32.totalorder %s91, %s92
    %p101 = scmp.eq.s32.totalorder %s18, 0
    %p102 = por %p100, %p101
    %p103 = scmp.ne.s32.totalorder %s91, %s92
    %p104 = scmp.eq.s32.totalorder %s19, 1
    %p105 = por %p103, %p104
    %p107 = scmp.ne.s32.totalorder %s92, %s106
    %p108 = scmp.eq.s32.totalorder %s19, 0
    %p109 = por %p107, %p108
    %s111 = sadd.s32 %s110, 1
    %p114 = scmp.eq.s32.totalorder %s13, 1
    %p115 = scmp.ne.s32.totalorder %s110, %s112
    %p116 = scmp.eq.s32.totalorder %s13, 0
    %p117 = por %p115, %p116
    %p118 = scmp.ne.s32.totalorder %s110, %s112
    %p119 = scmp.eq.s32.totalorder %s18, 1
    %p120 = por %p118, %p119
    %p121 = scmp.ne.s32.totalorder %s112, %s113
    %p122 = scmp.eq.s32.totalorder %s18, 0
    %p123 = por %p121, %p122
    %p124 = scmp.ne.s32.totalorder %s112, %s113
    %p125 = scmp.eq.s32.totalorder %s19, 1
    %p126 = por %p124, %p125
    %p128 = scmp.ne.s32.totalorder %s113, %s127
    %p129 = scmp.eq.s32.totalorder %s19, 0
    %p130 = por %p128, %p129
    %s131 = ssub.s32 %s13, %s20
    %p132 = scmp.eq.s32.totalorder %s131, 0
    %s134 = sadd.s32 %s133, 1
    %s135 = scalar_select %p132, %s133, %s134
    %p138 = pneg %p132
    %p139 = scmp.eq.s32.totalorder %s13, 1
    %p140 = por %p138, %p139
    %p141 = scmp.ne.s32.totalorder %s133, %s136
    %p142 = scmp.eq.s32.totalorder %s13, 0
    %p143 = por %p141, %p142
    %p144 = scmp.ne.s32.totalorder %s133, %s136
    %p145 = scmp.eq.s32.totalorder %s18, 1
    %p146 = por %p144, %p145
    %p147 = scmp.ne.s32.totalorder %s136, %s137
    %p148 = scmp.eq.s32.totalorder %s18, 0
    %p149 = por %p147, %p148
    %p150 = scmp.ne.s32.totalorder %s136, %s137
    %p151 = scmp.eq.s32.totalorder %s19, 1
    %p152 = por %p150, %p151
    %p154 = scmp.ne.s32.totalorder %s137, %s153
    %p155 = scmp.eq.s32.totalorder %s19, 0
    %p156 = por %p154, %p155
    %p157 = scmp.le.s32.totalorder 1, %s13
    %p158 = scmp.lt.s32.totalorder %s13, 3
    %p159 = pnand %p157, %p158
    %p160 = pneg %p159
    // Predicated region
    $region9: #{se_layer.1} parent=5 // pred_check
      _
    $region10: #{se_layer.1} parent=5 // pred_check_branch
      %162 = sbr.rel (%p159) target = $region12
    $region11: #{se_layer.1} parent=5 // pred_region
      %s163 = ssub.s32 %s13, 1
      // Predicated region
      $region13: #{se_layer.1} parent=11 // pred_check
        %p164 = pneg %p60
      $region14: #{se_layer.1} parent=11 // pred_check_branch
        %166 = sbr.rel (%p164) target = $region16
      $region15: #{se_layer.1} parent=11 // pred_region
        _
      $region16: #{se_layer.1} parent=11 // pred_fallthru
        _
      // Predicated region
      $region17: #{se_layer.1} parent=11 // pred_check
        %p167 = pneg %p81
      $region18: #{se_layer.1} parent=11 // pred_check_branch
        %169 = sbr.rel (%p167) target = $region20
      $region19: #{se_layer.1} parent=11 // pred_region
        _
      $region20: #{se_layer.1} parent=11 // pred_fallthru
        _
      // Predicated region
      $region21: #{se_layer.1} parent=11 // pred_check
        %p170 = pneg %p102
      $region22: #{se_layer.1} parent=11 // pred_check_branch
        %172 = sbr.rel (%p170) target = $region24
      $region23: #{se_layer.1} parent=11 // pred_region
        _
      $region24: #{se_layer.1} parent=11 // pred_fallthru
        _
      // Predicated region
      $region25: #{se_layer.1} parent=11 // pred_check
        %p173 = pneg %p123
      $region26: #{se_layer.1} parent=11 // pred_check_branch
        %175 = sbr.rel (%p173) target = $region28
      $region27: #{se_layer.1} parent=11 // pred_region
        _
      $region28: #{se_layer.1} parent=11 // pred_fallthru
        _
    $region12: #{se_layer.1} parent=5 // pred_fallthru
      _
    %p176 = scmp.lt.s32.totalorder %s13, 2
    // Predicated region
    $region29: #{se_layer.1} parent=5 // pred_check
      %p177 = pneg %p176
    $region30: #{se_layer.1} parent=5 // pred_check_branch
      %179 = sbr.rel (%p177) target = $region32
    $region31: #{se_layer.1} parent=5 // pred_region
      // Predicated region
      $region33: #{se_layer.1} parent=31 // pred_check
        %p180 = pneg %p33
      $region34: #{se_layer.1} parent=31 // pred_check_branch
        %182 = sbr.rel (%p180) target = $region36
      $region35: #{se_layer.1} parent=31 // pred_region
        %p183 = scmp.lt.s32.totalorder %s13, 1
        %s184 = scalar_select %p183, %s13, 1
        %s185 = smul.addr %s184, 2
        %s186 = smul.addr %s185, 4
        %s187 = scalar_lea.vmem %s0, %s186
      $region36: #{se_layer.1} parent=31 // pred_fallthru
        _
    $region32: #{se_layer.1} parent=5 // pred_fallthru
      _
    %p188 = scmp.le.s32.totalorder 1, %s13
    %p189 = scmp.lt.s32.totalorder %s13, 3
    %p190 = pnand %p188, %p189
    %p191 = pneg %p190
    // Predicated region
    $region37: #{se_layer.1} parent=5 // pred_check
      _
    $region38: #{se_layer.1} parent=5 // pred_check_branch
      %193 = sbr.rel (%p190) target = $region40
    $region39: #{se_layer.1} parent=5 // pred_region
      %s194 = ssub.s32 %s13, 1
      %p195 = scmp.lt.s32.totalorder %s18, 1
      %s196 = scalar_select %p195, %s18, 1
      %s197 = smul.addr %s196, 2
      %s198 = smul.addr %s197, 4
      %s199 = scalar_lea.vmem %s0, %s198
      %p200 = pneg %p39
      %p201 = pneg %p36
      %p202 = pneg %p60
      %p203 = pneg %p57
      %p204 = pneg %p81
      %p205 = pneg %p78
      %p206 = pneg %p102
      %p207 = pneg %p99
      %p208 = pneg %p123
      %p209 = pneg %p120
      %p210 = pneg %p149
      %p211 = pneg %p146
      %p212 = scmp.lt.s32.totalorder %s18, 1
      %s213 = scalar_select %p212, %s18, 1
      %s214 = smul.addr %s213, 2
      %s215 = smul.addr %s214, 4
      %s216 = scalar_lea.vmem %s5, %s215
      %p217 = scmp.lt.s32.totalorder %s18, 1
      %s218 = scalar_select %p217, %s18, 1
      %s219 = smul.addr %s218, 2
      %s220 = smul.addr %s219, 4
      %s221 = scalar_lea.vmem %s0, %s220
      %p222 = scmp.lt.s32.totalorder %s18, 1
      %s223 = scalar_select %p222, %s18, 1
      %s224 = smul.addr %s223, 2
      %s225 = smul.addr %s224, 4
      %s226 = scalar_lea.vmem %s5, %s225
      %v227 = vld [vmem:[%s221] sm:$0xff]
      %v229 = vcombine.high %v227, %v227
      %vm231 = vcmask 1043456
      %v232 = vsel %vm231, %v227, 0.0
      %v233 = vsel %vm231, %v229, 0.0
      %v234 = vadd.f32 %v232, %v233
      %235 = vadd.xlane.f32.xlu0 %v234
      %v236 = vpop.xlane.xlu0 %235
      %v237 = vmul.f32 %v236, 0.00390625
      %v238 = vld [vmem:[%s1] sm:$0xf]
      %v239 = vld [vmem:[#allocation2] sm:$0x1]
      %v241 = vlaneseq
      %v242 = vand.u32 %v241, 127
      %v243 = vlaneseq
      %v244 = vshrl.u32 %v243, 7
      %v245 = vsub.s32 %v242, %v244
      %v246 = vrot.slane %v237, %v245
      %vm247 = vcmask 31744
      %v248 = vsel %vm247, %v246, 0
      %v251 = vsel %vm231, %v238, 0
      %253 = vmatprep.subr.mxu0 0.0
      %254 = vmatpush1.msra.mxu0 %v251
      %255 = vmatprep.subr.mxu0 0.0
      %256 = vmatpush1.msra.mxu0 0.0
      %257 = vmatprep.subr.mxu0 0.0
      %258 = vmatpush1.msra.mxu0 0.0
      %259 = vmatprep.subr.mxu0 0.0
      %260 = vmatpush1.msra.mxu0 0.0
      %261 = vmatprep.subr.mxu0 0.0
      %262 = vmatpush1.msra.mxu0 0.0
      %263 = vmatprep.subr.mxu0 0.0
      %264 = vmatpush1.msra.mxu0 0.0
      %265 = vmatprep.subr.mxu0 0.0
      %266 = vmatpush1.msra.mxu0 0.0
      %267 = vmatprep.subr.mxu0 0.0
      %268 = vmatpush1.msra.mxu0 0.0
      %269 = vmatprep.subr.mxu0 0.0
      %270 = vmatpush1.msra.mxu0 0.0
      %271 = vmatprep.subr.mxu0 0.0
      %272 = vmatpush1.msra.mxu0 0.0
      %273 = vmatprep.subr.mxu0 0.0
      %274 = vmatpush1.msra.mxu0 0.0
      %275 = vmatprep.subr.mxu0 0.0
      %276 = vmatpush1.msra.mxu0 0.0
      %277 = vmatprep.subr.mxu0 0.0
      %278 = vmatpush1.msra.mxu0 0.0
      %279 = vmatprep.subr.mxu0 0.0
      %280 = vmatpush1.msra.mxu0 0.0
      %281 = vmatprep.subr.mxu0 0.0
      %282 = vmatpush1.msra.mxu0 0.0
      %283 = vmatprep.subr.mxu0 0.0
      %284 = vmatpush1.msra.mxu0 0.0
      %285 = vmatprep.subr.mxu0 0.0
      %286 = vmatpush1.msra.mxu0 0.0
      %287 = vmatprep.subr.mxu0 0.0
      %288 = vmatpush1.msra.mxu0 0.0
      %289 = vmatprep.subr.mxu0 0.0
      %290 = vmatpush1.msra.mxu0 0.0
      %291 = vmatprep.subr.mxu0 0.0
      %292 = vmatpush1.msra.mxu0 0.0
      %293 = vmatprep.subr.mxu0 0.0
      %294 = vmatpush1.msra.mxu0 0.0
      %295 = vmatprep.subr.mxu0 0.0
      %296 = vmatpush1.msra.mxu0 0.0
      %297 = vmatprep.subr.mxu0 0.0
      %298 = vmatpush1.msra.mxu0 0.0
      %299 = vmatprep.subr.mxu0 0.0
      %300 = vmatpush1.msra.mxu0 0.0
      %301 = vmatprep.subr.mxu0 0.0
      %302 = vmatpush1.msra.mxu0 0.0
      %303 = vmatprep.subr.mxu0 0.0
      %304 = vmatpush1.msra.mxu0 0.0
      %305 = vmatprep.subr.mxu0 0.0
      %306 = vmatpush1.msra.mxu0 0.0
      %307 = vmatprep.subr.mxu0 0.0
      %308 = vmatpush1.msra.mxu0 0.0
      %309 = vmatprep.subr.mxu0 0.0
      %310 = vmatpush1.msra.mxu0 0.0
      %311 = vmatprep.subr.mxu0 0.0
      %312 = vmatpush1.msra.mxu0 0.0
      %313 = vmatprep.subr.mxu0 0.0
      %314 = vmatpush1.msra.mxu0 0.0
      %315 = vmatprep.subr.mxu0 0.0
      %316 = vmatpush1.msra.mxu0 0.0
      %317 = vmatprep.mubr.f32.mxu0 0.0
      %318 = vmatmul.mubr.f32.gmra.mrb[0].mxu0 %v248
      %v319 = vpop.f32.mrb[0].mxu0
      %v320 = vadd.f32 %v239, %v319
      %v321 = vpop.f32.mrb[0].mxu0
      %322 = vdwg.mxu0
      %v323 = vmax.f32 %v320, 0.0
      %v324 = vld [vmem:[%s3] sm:$0x1]
      %v325 = vld [vmem:[%s4] sm:$0x1]
      %vm326 = vcmask 7168
      %v328 = vsel %vm326, %v323, 0
      %vm330 = vcmask 1040384
      %v332 = vsel %vm330, %v324, 0
      %334 = vmatprep.subr.mxu0 0.0
      %335 = vmatpush1.msra.mxu0 %v332
      %336 = vmatprep.subr.mxu0 0.0
      %337 = vmatpush1.msra.mxu0 0.0
      %338 = vmatprep.subr.mxu0 0.0
      %339 = vmatpush1.msra.mxu0 0.0
      %340 = vmatprep.subr.mxu0 0.0
      %341 = vmatpush1.msra.mxu0 0.0
      %342 = vmatprep.subr.mxu0 0.0
      %343 = vmatpush1.msra.mxu0 0.0
      %344 = vmatprep.subr.mxu0 0.0
      %345 = vmatpush1.msra.mxu0 0.0
      %346 = vmatprep.subr.mxu0 0.0
      %347 = vmatpush1.msra.mxu0 0.0
      %348 = vmatprep.subr.mxu0 0.0
      %349 = vmatpush1.msra.mxu0 0.0
      %350 = vmatprep.subr.mxu0 0.0
      %351 = vmatpush1.msra.mxu0 0.0
      %352 = vmatprep.subr.mxu0 0.0
      %353 = vmatpush1.msra.mxu0 0.0
      %354 = vmatprep.subr.mxu0 0.0
      %355 = vmatpush1.msra.mxu0 0.0
      %356 = vmatprep.subr.mxu0 0.0
      %357 = vmatpush1.msra.mxu0 0.0
      %358 = vmatprep.subr.mxu0 0.0
      %359 = vmatpush1.msra.mxu0 0.0
      %360 = vmatprep.subr.mxu0 0.0
      %361 = vmatpush1.msra.mxu0 0.0
      %362 = vmatprep.subr.mxu0 0.0
      %363 = vmatpush1.msra.mxu0 0.0
      %364 = vmatprep.subr.mxu0 0.0
      %365 = vmatpush1.msra.mxu0 0.0
      %366 = vmatprep.subr.mxu0 0.0
      %367 = vmatpush1.msra.mxu0 0.0
      %368 = vmatprep.subr.mxu0 0.0
      %369 = vmatpush1.msra.mxu0 0.0
      %370 = vmatprep.subr.mxu0 0.0
      %371 = vmatpush1.msra.mxu0 0.0
      %372 = vmatprep.subr.mxu0 0.0
      %373 = vmatpush1.msra.mxu0 0.0
      %374 = vmatprep.subr.mxu0 0.0
      %375 = vmatpush1.msra.mxu0 0.0
      %376 = vmatprep.subr.mxu0 0.0
      %377 = vmatpush1.msra.mxu0 0.0
      %378 = vmatprep.subr.mxu0 0.0
      %379 = vmatpush1.msra.mxu0 0.0
      %380 = vmatprep.subr.mxu0 0.0
      %381 = vmatpush1.msra.mxu0 0.0
      %382 = vmatprep.subr.mxu0 0.0
      %383 = vmatpush1.msra.mxu0 0.0
      %384 = vmatprep.subr.mxu0 0.0
      %385 = vmatpush1.msra.mxu0 0.0
      %386 = vmatprep.subr.mxu0 0.0
      %387 = vmatpush1.msra.mxu0 0.0
      %388 = vmatprep.subr.mxu0 0.0
      %389 = vmatpush1.msra.mxu0 0.0
      %390 = vmatprep.subr.mxu0 0.0
      %391 = vmatpush1.msra.mxu0 0.0
      %392 = vmatprep.subr.mxu0 0.0
      %393 = vmatpush1.msra.mxu0 0.0
      %394 = vmatprep.subr.mxu0 0.0
      %395 = vmatpush1.msra.mxu0 0.0
      %396 = vmatprep.subr.mxu0 0.0
      %397 = vmatpush1.msra.mxu0 0.0
      %398 = vmatprep.mubr.f32.mxu0 0.0
      %399 = vmatmul.mubr.f32.gmra.mrb[0].mxu0 %v328
      %v400 = vpop.f32.mrb[0].mxu0
      %v401 = vadd.f32 %v325, %v400
      %v402 = vpop.f32.mrb[0].mxu0
      %403 = vdwg.mxu0
      %v404 = vadd.f32 %v401, 3.0
      %v405 = vmax.f32 %v404, 0.0
      %v406 = vmin.f32 %v405, 6.0
      %v407 = vmul.f32 %v406, 0.16666667
      %v408 = vlaneseq
      %v409 = vshrl.u32 %v408, 7
      %v410 = vsub.s32 0, %v409
      %v411 = vrot.slane %v407, %v410
      %413 = vbcast.lane.b32.xlu0 %v411, 256
      %v414 = vpop.permute.xlu0 %413
      %v417 = vunpack.c.l.s4 839922192
      %v418 = vunpack.c.0.s8 %v417
      %v419 = vlaneseq
      %v420 = vshrl.u32 %v419, 7
      %v421 = vsub.s32 %v418, %v420
      %v422 = vrot.slane %v414, %v421
      %v424 = vmul.f32 %v227, %v422
      %425 = vst [vmem:[%s226] sm:$0xff] %v424
      %p426 = scmp.lt.s32.totalorder %s18, 1
      %s427 = scalar_select %p426, %s18, 1
      %s428 = smul.addr %s427, 2
      %s429 = smul.addr %s428, 4
      %s430 = scalar_lea.vmem %s5, %s429
      // Predicated region
      $region41: #{se_layer.1} parent=39 // pred_check
        %p431 = pneg %p146
      $region42: #{se_layer.1} parent=39 // pred_check_branch
        %433 = sbr.rel (%p431) target = $region44
      $region43: #{se_layer.1} parent=39 // pred_region
        _
      $region44: #{se_layer.1} parent=39 // pred_fallthru
        _
    $region40: #{se_layer.1} parent=5 // pred_fallthru
      _
    %p434 = scmp.le.s32.totalorder 2, %s13
    // Predicated region
    $region45: #{se_layer.1} parent=5 // pred_check
      %p435 = pneg %p434
    $region46: #{se_layer.1} parent=5 // pred_check_branch
      %437 = sbr.rel (%p435) target = $region48
    $region47: #{se_layer.1} parent=5 // pred_region
      %s438 = ssub.s32 %s13, 2
      // Predicated region
      $region49: #{se_layer.1} parent=47 // pred_check
        %p439 = pneg %p152
      $region50: #{se_layer.1} parent=47 // pred_check_branch
        %441 = sbr.rel (%p439) target = $region52
      $region51: #{se_layer.1} parent=47 // pred_region
        %p442 = scmp.lt.s32.totalorder %s19, 1
        %s443 = scalar_select %p442, %s19, 1
        %s444 = smul.addr %s443, 2
        %s445 = smul.addr %s444, 4
        %s446 = scalar_lea.vmem %s5, %s445
      $region52: #{se_layer.1} parent=47 // pred_fallthru
        _
    $region48: #{se_layer.1} parent=5 // pred_fallthru
      _
  $region6: #{se_layer.1} parent=0 // loop_footer
    %s17 = sadd.s32 1, %s13
  $region7: #{se_layer.1} parent=0 // loop_footer_branch
    %12 = sbr.rel target = $region3
  $region8: #{se_layer.1} parent=0 // loop_exit
    _

</llo_original>
